<compile_context>
chip_gen: v6e
topology: v6e:2x2x1
jax: 0.10.0
libtpu: 0.0.40
codegen_flags: <defaults>
</compile_context>

<pallas_src>
import jax
import jax.numpy as jnp
from jax.experimental import pallas as pl
from jax.experimental.pallas import tpu as pltpu


# ----------------------------- kernels --------------------------------------


def _receiver_kernel_fused(x_ref, w_ref, b_ref, o_ref):
    """K collapsed into a single tile: one MXU dot, bias add, lane-dense store."""
    acc = jnp.dot(x_ref[...], w_ref[...], preferred_element_type=jnp.float32)
    o_ref[...] = (acc + b_ref[...].astype(jnp.float32)).astype(o_ref.dtype)


def _receiver_kernel_ksplit(x_ref, w_ref, b_ref, o_ref, acc_ref):
    """K-reduction grid axis (axis 2); bias folded into the accumulator init."""

    @pl.when(pl.program_id(2) == 0)
    def _init():
        acc_ref[...] = jnp.broadcast_to(
            b_ref[...].astype(jnp.float32), acc_ref.shape
        )

    acc_ref[...] += jnp.dot(
        x_ref[...], w_ref[...], preferred_element_type=jnp.float32
    )

    @pl.when(pl.program_id(2) == pl.num_programs(2) - 1)
    def _finalize():
        o_ref[...] = acc_ref[...].astype(o_ref.dtype)


# ----------------------------- helpers --------------------------------------


def _round_up(v, m):
    return ((v + m - 1) // m) * m


def _largest_divisor_tile(dim, step, cap):
    """Largest multiple of `step`, <= cap, that divides `dim` (dim % step == 0)."""
    t = min((max(cap, step) // step) * step, dim)
    while t > step and dim % t:
        t -= step
    return t


# ----------------------------- wrapper ---------------------------------------


def receiver_forward(x, w_t, b, _unused=None, *, compute_dtype=None):
    """y = x @ w_t + b.  x: (M, K), w_t: (K, N) (transposed nn.Linear weight), b: (N,).

    `_unused` mirrors Receiver.forward's ignored second argument.
    `compute_dtype` optionally casts x / w_t (e.g. jnp.bfloat16); accumulation and
    the bias add stay f32 and the output keeps x's original dtype.
    """
    out_dtype = x.dtype
    if compute_dtype is not None:
        x = x.astype(compute_dtype)
        w_t = w_t.astype(compute_dtype)

    M, K = x.shape
    K2, N = w_t.shape
    assert K == K2, (K, K2)

    in_isz = jnp.dtype(x.dtype).itemsize
    out_isz = jnp.dtype(out_dtype).itemsize
    sub = 8 if in_isz >= 4 else (16 if in_isz == 2 else 32)  # sublane packing

    # Pad to legal (sublane, lane) multiples; padded rows/cols are sliced off later.
    Mp, Kp, Np = _round_up(M, sub), _round_up(K, 128), _round_up(N, 128)
    if (Mp, Kp) != (M, K):
        x = jnp.pad(x, ((0, Mp - M), (0, Kp - K)))
    if (Kp, Np) != (K, N):
        w_t = jnp.pad(w_t, ((0, Kp - K), (0, Np - N)))
    b2 = b.astype(jnp.float32)
    if Np != N:
        b2 = jnp.pad(b2, (0, Np - N))
    b2 = b2.reshape(1, Np)

    # ---- tile selection -----------------------------------------------------
    BUDGET = 24 * 1024 * 1024  # double-buffered footprint target; safe on v7x (64 MiB)
    collapse_k = Kp <= (2048 if in_isz >= 4 else 4096)
    tm = _largest_divisor_tile(Mp, sub, 256)
    tn = _largest_divisor_tile(Np, 128, 512)
    tk = Kp if collapse_k else _largest_divisor_tile(Kp, 128, 512)

    def footprint(tm_, tn_, tk_, ksplit):
        f = 2 * ((tm_ * tk_ + tk_ * tn_) * in_isz + tn_ * 4 + tm_ * tn_ * out_isz)
        if ksplit:
            f += tm_ * tn_ * 4  # f32 accumulator scratch
        return f

    while footprint(tm, tn, tk, not collapse_k) > BUDGET:
        if tn > 128:
            tn = _largest_divisor_tile(Np, 128, tn // 2)
        elif collapse_k and tk > 128:
            collapse_k = False
            tk = _largest_divisor_tile(Kp, 128, max(tk // 2, 128))
        elif (not collapse_k) and tk > 128:
            tk = _largest_divisor_tile(Kp, 128, tk // 2)
        elif tm > sub:
            tm = _largest_divisor_tile(Mp, sub, tm // 2)
        else:
            break

    # v7x has 2 TensorCores: if the parallel grid would be a single step, split N
    # (preferred: keeps the output lane-dense) or M so both cores get work.
    if (Mp // tm) * (Np // tn) == 1:
        if Np >= 256:
            tn = _largest_divisor_tile(Np, 128, Np // 2)
        elif Mp >= 2 * sub:
            tm = _largest_divisor_tile(Mp, sub, Mp // 2)

    cost = pl.CostEstimate(
        flops=2 * Mp * Np * Kp,
        transcendentals=0,
        bytes_accessed=(Mp * Kp + Kp * Np) * in_isz + Np * 4 + Mp * Np * out_isz,
    )

    if collapse_k:
        grid = (Mp // tm, Np // tn)
        in_specs = [
            # x block index is (i, 0): constant across the inner N axis, so the
            # x tile stays VMEM-resident across output-column tiles (no re-DMA).
            pl.BlockSpec((tm, Kp), lambda i, j: (i, 0)),
            pl.BlockSpec((Kp, tn), lambda i, j: (0, j)),
            pl.BlockSpec((1, tn), lambda i, j: (0, j)),
        ]
        out_spec = pl.BlockSpec((tm, tn), lambda i, j: (i, j))
        kernel = _receiver_kernel_fused
        scratch = []
        dims = ("parallel", "parallel")
    else:
        grid = (Mp // tm, Np // tn, Kp // tk)
        in_specs = [
            pl.BlockSpec((tm, tk), lambda i, j, k: (i, k)),
            pl.BlockSpec((tk, tn), lambda i, j, k: (k, j)),
            pl.BlockSpec((1, tn), lambda i, j, k: (0, j)),
        ]
        out_spec = pl.BlockSpec((tm, tn), lambda i, j, k: (i, j))
        kernel = _receiver_kernel_ksplit
        scratch = [pltpu.VMEM((tm, tn), jnp.float32)]
        dims = ("parallel", "parallel", "arbitrary")

    y = pl.pallas_call(
        kernel,
        out_shape=jax.ShapeDtypeStruct((Mp, Np), out_dtype),
        grid_spec=pltpu.PrefetchScalarGridSpec(
            num_scalar_prefetch=0,
            grid=grid,
            in_specs=in_specs,
            out_specs=out_spec,
            scratch_shapes=scratch,
        ),
        compiler_params=pltpu.CompilerParams(
            dimension_semantics=dims,
            # 32 MiB scoped VMEM: >= default everywhere, well under v7x's 64 MiB.
            vmem_limit_bytes=32 * 1024 * 1024,
        ),
        cost_estimate=cost,
    )(x, w_t, b2)

    if (Mp, Np) != (M, N):
        y = y[:M, :N]
    return y


# ----------------------------- test ------------------------------------------


if __name__ == "__main__":
    key = jax.random.PRNGKey(0)
    kx, kw, kb, kz = jax.random.split(key, 4)

    # Small shapes consistent with Receiver(n_outputs, n_hidden).
    B, n_hidden, n_outputs = 16, 128, 256

    x = jax.random.normal(kx, (B, n_hidden), dtype=jnp.float32)
    # nn.Linear(n_hidden, n_outputs) stores weight as (n_outputs, n_hidden);
    # we pass its transpose (n_hidden, n_outputs) so the kernel is x @ W.T + b.
    w_t = jax.random.normal(kw, (n_hidden, n_outputs), dtype=jnp.float32) * 0.02
    bias = jax.random.normal(kb, (n_outputs,), dtype=jnp.float32) * 0.02
    unused = jax.random.normal(kz, (B, 8), dtype=jnp.float32)  # ignored `_` arg

    ref = jnp.dot(x, w_t, precision=jax.lax.Precision.HIGHEST) + bias[None, :]

    # f32 path (default: kernel compute dtype follows the input dtype).
    y = receiver_forward(x, w_t, bias, unused)
    jax.block_until_ready(y)
    assert y.shape == (B, n_outputs) and y.dtype == x.dtype
    err = float(jnp.max(jnp.abs(y - ref)))
    assert err < 1e-3, f"f32 max abs err = {err}"

    # bf16 compute path: native MXU dtype, half the weight HBM stream, f32 accumulate.
    y_bf16 = receiver_forward(x, w_t, bias, unused, compute_dtype=jnp.bfloat16)
    jax.block_until_ready(y_bf16)
    err_bf16 = float(jnp.max(jnp.abs(y_bf16 - ref)))
    assert err_bf16 < 3e-2, f"bf16 max abs err = {err_bf16}"

    # Unaligned shapes exercise the pad-then-slice path.
    B2, h2, o2 = 10, 96, 100
    x2 = jax.random.normal(kx, (B2, h2), dtype=jnp.float32)
    w2 = jax.random.normal(kw, (h2, o2), dtype=jnp.float32) * 0.02
    b2v = jax.random.normal(kb, (o2,), dtype=jnp.float32) * 0.02
    y2 = receiver_forward(x2, w2, b2v, None)
    jax.block_until_ready(y2)
    ref2 = jnp.dot(x2, w2, precision=jax.lax.Precision.HIGHEST) + b2v[None, :]
    err2 = float(jnp.max(jnp.abs(y2 - ref2)))
    assert err2 < 1e-3, f"padded f32 max abs err = {err2}"

    print("KERNEL_OK")
</pallas_src>

<mosaic_0001>
module attributes {stable_mosaic.version = 11 : i64} {
  func.func @_receiver_kernel_fused(%arg0: i32, %arg1: i32, %arg2: memref<16x128xf32, #tpu.memory_space<vmem>>, %arg3: memref<128x128xf32, #tpu.memory_space<vmem>>, %arg4: memref<1x128xf32, #tpu.memory_space<vmem>>, %arg5: memref<16x128xf32, #tpu.memory_space<vmem>>) attributes {dimension_semantics = [#tpu.dimension_semantics<parallel>, #tpu.dimension_semantics<parallel>], iteration_bounds = array<i64: 1, 2>, scalar_prefetch = 0 : i64, scratch_operands = 0 : i64, tpu.core_type = #tpu.core_type<tc>, window_params = [{transform_indices = @transform_0, window_bounds = array<i64: 16, 128>}, {transform_indices = @transform_1, window_bounds = array<i64: 128, 128>}, {transform_indices = @transform_2, window_bounds = array<i64: 1, 128>}, {transform_indices = @transform_3, window_bounds = array<i64: 16, 128>}]} {
    %c0 = arith.constant 0 : index
    %c0_0 = arith.constant 0 : index
    %0 = vector.load %arg2[%c0, %c0_0] : memref<16x128xf32, #tpu.memory_space<vmem>>, vector<16x128xf32>
    %c0_1 = arith.constant 0 : index
    %c0_2 = arith.constant 0 : index
    %1 = vector.load %arg3[%c0_1, %c0_2] : memref<128x128xf32, #tpu.memory_space<vmem>>, vector<128x128xf32>
    %cst = arith.constant dense<0.000000e+00> : vector<16x128xf32>
    %2 = tpu.matmul %0, %1, %cst {dimension_numbers = #tpu.dot_dimension_numbers<[1], [0], [0], [1], [0, 0, 1, 1], [], []>} : vector<16x128xf32>, vector<128x128xf32>, vector<16x128xf32> -> vector<16x128xf32>
    %c0_3 = arith.constant 0 : index
    %c0_4 = arith.constant 0 : index
    %3 = vector.load %arg4[%c0_3, %c0_4] : memref<1x128xf32, #tpu.memory_space<vmem>>, vector<1x128xf32>
    %4 = vector.broadcast %3 : vector<1x128xf32> to vector<16x128xf32>
    %5 = arith.addf %2, %4 : vector<16x128xf32>
    %c0_5 = arith.constant 0 : index
    %c0_6 = arith.constant 0 : index
    %6 = vector.load %arg5[%c0_5, %c0_6] : memref<16x128xf32, #tpu.memory_space<vmem>>, vector<16x128xf32>
    tpu.vector_store %arg5[%c0_5, %c0_6], %5 {strides = array<i32>} : memref<16x128xf32, #tpu.memory_space<vmem>>, vector<16x128xf32>,
    return
  }
  func.func @transform_0(%arg0: i32, %arg1: i32) -> (i32, i32) {
    %c0_i32 = arith.constant 0 : i32
    %c0_i32_0 = arith.constant 0 : i32
    return %arg0, %c0_i32 : i32, i32
  }
  func.func @transform_1(%arg0: i32, %arg1: i32) -> (i32, i32) {
    %c0_i32 = arith.constant 0 : i32
    %c0_i32_0 = arith.constant 0 : i32
    return %c0_i32, %arg1 : i32, i32
  }
  func.func @transform_2(%arg0: i32, %arg1: i32) -> (i32, i32) {
    %c0_i32 = arith.constant 0 : i32
    %c0_i32_0 = arith.constant 0 : i32
    return %c0_i32, %arg1 : i32, i32
  }
  func.func @transform_3(%arg0: i32, %arg1: i32) -> (i32, i32) {
    %c0_i32 = arith.constant 0 : i32
    return %arg0, %arg1 : i32, i32
  }
}

</mosaic_0001>

<llo_original>
// kernel: tpu_custom_call.1
$region0: #{tpu_custom_call.1}
  #allocation0 [shape = 'u32[]', space=smem, size = 0x4, offset = 0x4, fixed_abs, tag = 'smem constant byte address 0x4 - core index']
  #allocation1 [shape = 'u32[144,128]{1,0:T(1,128)}', space=vmem, size = 0x12000, scoped, tag = 'internal scratch']
  %s0 = inlined_call_operand.hbm [shape: f32[16,128], index: 0, kind: input, shape index: {}]
  %s1 = inlined_call_operand.hbm [shape: f32[128,256], index: 1, kind: input, shape index: {}]
  %s2 = inlined_call_operand.vmem [shape: f32[1,256], index: 2, kind: input, shape index: {}]
  %s3 = inlined_call_operand.hbm [shape: f32[16,256], index: 3, kind: output, shape index: {}]
  %s4 = sld [smem:[#allocation0]]
  $region53: #{tpu_custom_call.1} parent=0
    _
  %s6 = ssub.s32 1, %s4
  %s7 = scalar_select 0, %s6, %s4
  $region1: #{tpu_custom_call.1} parent=0
    #allocation2 [shape = 'u8[8192]{0}', space=vmem, size = 0x2000, scoped, tag = 'input window, operand 0, single buffered']
    #allocation3 [shape = 's32[2]{0}', space=sflag, size = 0x8, scoped, tag = 'scoped memory for tpu_custom_call.1']
    #allocation4 [shape = 's32[2]{0}', space=sflag, size = 0x8, scoped, tag = 'scoped memory for tpu_custom_call.1']
    #allocation5 [shape = 'u8[131072]{0}', space=vmem, size = 0x20000, scoped, tag = 'input window, operand 1']
    #allocation6 [shape = 's32[2]{0}', space=sflag, size = 0x8, scoped, tag = 'scoped memory for tpu_custom_call.1']
    #allocation7 [shape = 'u8[16384]{0}', space=vmem, size = 0x4000, scoped, tag = 'output window, operand 0']
    %8 = vsyncpa [#allocation3], 0
    %9 = vsyncpa [#allocation6], 0
    %s10 = scalar_lea.sflag [#allocation6], 1
    %11 = vsyncpa %s10, 0
    %12 = vsyncpa [#allocation4], 0
    %s13 = scalar_lea.sflag [#allocation4], 1
    %14 = vsyncpa %s13, 0
    loop: start=0, step=1, limit=4
    $region2: #{tpu_custom_call.1} parent=1 // loop_pre_header
      _
    $region3: #{tpu_custom_call.1} parent=1 // loop_header
      %s16 = sphi 0, %s20
      %p17 = scmp.ge.s32.totalorder %s16, 4
      %s23 = sphi 0, %s35
      %s24 = sphi 0, %s31
      %s25 = sphi 0, %s23
      %s26 = sphi 0, %s24
      %s27 = sphi 0, %s25
      %s28 = sphi 0, %s26
      %s38 = sphi 0, %s40
      %s41 = sphi 0, %s38
      %s42 = sphi 0, %s41
      %s58 = sphi 0, %s42
      %s64 = sphi 0, %s66
      %s67 = sphi 0, %s64
      %s68 = sphi 0, %s67
      %s84 = sphi 0, %s68
      %s90 = sphi 0, %s92
      %s93 = sphi 0, %s90
      %s94 = sphi 0, %s93
      %s110 = sphi 0, %s94
      %s118 = sphi 0, %s120
      %s121 = sphi 0, %s118
      %s122 = sphi 0, %s121
      %s138 = sphi 0, %s122
    $region4: #{tpu_custom_call.1} parent=1 // loop_header_branch
      %19 = sbr.rel (%p17) target = $region8
    $region5: #{tpu_custom_call.1} parent=1 // loop_body
      %s21 = ssub.s32 %s16, 1
      %s22 = ssub.s32 %s16, 2
      %s29 = sadd.s32 1, %s24
      %p30 = scmp.ge.s32.totalorder %s29, 2
      %s31 = scalar_select %p30, 0, %s29
      %s32 = sadd.s32 1, %s23
      %s33 = scalar_select %p30, %s32, %s23
      %p34 = scmp.ge.s32.totalorder %s33, 1
      %s35 = scalar_select %p34, 0, %s33
      %s36 = ssub.s32 %s23, %s35
      %p37 = scmp.eq.s32.totalorder %s36, 0
      %s39 = sadd.s32 %s38, 1
      %s40 = scalar_select %p37, %s38, %s39
      %p43 = pneg %p37
      %p44 = scmp.eq.s32.totalorder %s16, 1
      %p45 = por %p43, %p44
      %p46 = scmp.ne.s32.totalorder %s38, %s41
      %p47 = scmp.eq.s32.totalorder %s16, 0
      %p48 = por %p46, %p47
      %p49 = scmp.ne.s32.totalorder %s38, %s41
      %p50 = scmp.eq.s32.totalorder %s21, 1
      %p51 = por %p49, %p50
      %p52 = scmp.ne.s32.totalorder %s41, %s42
      %p53 = scmp.eq.s32.totalorder %s21, 0
      %p54 = por %p52, %p53
      %p55 = scmp.ne.s32.totalorder %s41, %s42
      %p56 = scmp.eq.s32.totalorder %s22, 1
      %p57 = por %p55, %p56
      %p59 = scmp.ne.s32.totalorder %s42, %s58
      %p60 = scmp.eq.s32.totalorder %s22, 0
      %p61 = por %p59, %p60
      %s62 = ssub.s32 %s24, %s31
      %p63 = scmp.eq.s32.totalorder %s62, 0
      %s65 = sadd.s32 %s64, 1
      %s66 = scalar_select %p63, %s64, %s65
      %p69 = pneg %p63
      %p70 = scmp.eq.s32.totalorder %s16, 1
      %p71 = por %p69, %p70
      %p72 = scmp.ne.s32.totalorder %s64, %s67
      %p73 = scmp.eq.s32.totalorder %s16, 0
      %p74 = por %p72, %p73
      %p75 = scmp.ne.s32.totalorder %s64, %s67
      %p76 = scmp.eq.s32.totalorder %s21, 1
      %p77 = por %p75, %p76
      %p78 = scmp.ne.s32.totalorder %s67, %s68
      %p79 = scmp.eq.s32.totalorder %s21, 0
      %p80 = por %p78, %p79
      %p81 = scmp.ne.s32.totalorder %s67, %s68
      %p82 = scmp.eq.s32.totalorder %s22, 1
      %p83 = por %p81, %p82
      %p85 = scmp.ne.s32.totalorder %s68, %s84
      %p86 = scmp.eq.s32.totalorder %s22, 0
      %p87 = por %p85, %p86
      %s88 = ssub.s32 %s24, %s31
      %p89 = scmp.eq.s32.totalorder %s88, 0
      %s91 = sadd.s32 %s90, 1
      %s92 = scalar_select %p89, %s90, %s91
      %p95 = pneg %p89
      %p96 = scmp.eq.s32.totalorder %s16, 1
      %p97 = por %p95, %p96
      %p98 = scmp.ne.s32.totalorder %s90, %s93
      %p99 = scmp.eq.s32.totalorder %s16, 0
      %p100 = por %p98, %p99
      %p101 = scmp.ne.s32.totalorder %s90, %s93
      %p102 = scmp.eq.s32.totalorder %s21, 1
      %p103 = por %p101, %p102
      %p104 = scmp.ne.s32.totalorder %s93, %s94
      %p105 = scmp.eq.s32.totalorder %s21, 0
      %p106 = por %p104, %p105
      %p107 = scmp.ne.s32.totalorder %s93, %s94
      %p108 = scmp.eq.s32.totalorder %s22, 1
      %p109 = por %p107, %p108
      %p111 = scmp.ne.s32.totalorder %s94, %s110
      %p112 = scmp.eq.s32.totalorder %s22, 0
      %p113 = por %p111, %p112
      %s114 = ssub.s32 %s23, %s35
      %s115 = ssub.s32 %s24, %s31
      %s116 = sor.u32 %s114, %s115
      %p117 = scmp.eq.s32.totalorder %s116, 0
      %s119 = sadd.s32 %s118, 1
      %s120 = scalar_select %p117, %s118, %s119
      %p123 = pneg %p117
      %p124 = scmp.eq.s32.totalorder %s16, 1
      %p125 = por %p123, %p124
      %p126 = scmp.ne.s32.totalorder %s118, %s121
      %p127 = scmp.eq.s32.totalorder %s16, 0
      %p128 = por %p126, %p127
      %p129 = scmp.ne.s32.totalorder %s118, %s121
      %p130 = scmp.eq.s32.totalorder %s21, 1
      %p131 = por %p129, %p130
      %p132 = scmp.ne.s32.totalorder %s121, %s122
      %p133 = scmp.eq.s32.totalorder %s21, 0
      %p134 = por %p132, %p133
      %p135 = scmp.ne.s32.totalorder %s121, %s122
      %p136 = scmp.eq.s32.totalorder %s22, 1
      %p137 = por %p135, %p136
      %p139 = scmp.ne.s32.totalorder %s122, %s138
      %p140 = scmp.eq.s32.totalorder %s22, 0
      %p141 = por %p139, %p140
      %p142 = scmp.le.s32.totalorder 1, %s16
      %p143 = scmp.lt.s32.totalorder %s16, 3
      %p144 = pnand %p142, %p143
      %p145 = pneg %p144
      // Predicated region
      $region9: #{tpu_custom_call.1} parent=5 // pred_check
        _
      $region10: #{tpu_custom_call.1} parent=5 // pred_check_branch
        %147 = sbr.rel (%p144) target = $region12
      $region11: #{tpu_custom_call.1} parent=5 // pred_region
        %s148 = ssub.s32 %s16, 1
        // Predicated region
        $region13: #{tpu_custom_call.1} parent=11 // pred_check
          %p149 = pneg %p54
        $region14: #{tpu_custom_call.1} parent=11 // pred_check_branch
          %151 = sbr.rel (%p149) target = $region16
        $region15: #{tpu_custom_call.1} parent=11 // pred_region
          %s152 = smul.u32 2, %s25
          %s154 = ssub.s32 256, 256
          %155 = vsyncadd [#allocation3], %s154
          %s156 = smul.addr %s152, 128
          %s157 = scalar_lea.hbm %s0, %s156
          %s158 = sshll.u32 [#allocation2], 4
          %s159 = int_to_ptr.vmem [resolvable:$true] %s158
          %164 = dma.hbm_to_vmem [thread:$0]  %s157, 256, %s159, [#allocation3], 128, 128, 8
        $region16: #{tpu_custom_call.1} parent=11 // pred_fallthru
          _
      $region12: #{tpu_custom_call.1} parent=5 // pred_fallthru
        _
      %p165 = scmp.lt.s32.totalorder %s16, 2
      // Predicated region
      $region17: #{tpu_custom_call.1} parent=5 // pred_check
        %p166 = pneg %p165
      $region18: #{tpu_custom_call.1} parent=5 // pred_check_branch
        %168 = sbr.rel (%p166) target = $region20
      $region19: #{tpu_custom_call.1} parent=5 // pred_region
        // Predicated region
        $region21: #{tpu_custom_call.1} parent=19 // pred_check
          %p169 = pneg %p74
        $region22: #{tpu_custom_call.1} parent=19 // pred_check_branch
          %171 = sbr.rel (%p169) target = $region24
        $region23: #{tpu_custom_call.1} parent=19 // pred_region
          %s172 = sand.u32 %s64, 1
          %s173 = scalar_lea.sflag [#allocation6], %s172
          %s174 = sand.u32 %s64, 1
          %s175 = smul.addr %s174, 128
          %s176 = scalar_lea.vmem [#allocation5], %s175
          %s178 = ssub.s32 2048, 2048
          %179 = vsyncadd %s173, %s178
          %s180 = smul.addr %s24, 128
          %s181 = scalar_lea.hbm %s1, %s180
          %s182 = sshll.u32 %s176, 4
          %s183 = int_to_ptr.vmem [resolvable:$true] %s182
          %188 = dma.hbm_to_vmem [thread:$0]  %s181, 2048, %s183, %s173, 256, 128, 8
        $region24: #{tpu_custom_call.1} parent=19 // pred_fallthru
          _
        // Predicated region
        $region25: #{tpu_custom_call.1} parent=19 // pred_check
          %p189 = pneg %p100
        $region26: #{tpu_custom_call.1} parent=19 // pred_check_branch
          %191 = sbr.rel (%p189) target = $region28
        $region27: #{tpu_custom_call.1} parent=19 // pred_region
          %p192 = scmp.lt.s32.totalorder %s24, 1
          %s193 = scalar_select %p192, %s24, 1
          %s194 = scalar_lea.vmem %s2, %s193
        $region28: #{tpu_custom_call.1} parent=19 // pred_fallthru
          _
      $region20: #{tpu_custom_call.1} parent=5 // pred_fallthru
        _
      %p195 = scmp.le.s32.totalorder 1, %s16
      %p196 = scmp.lt.s32.totalorder %s16, 3
      %p197 = pnand %p195, %p196
      %p198 = pneg %p197
      // Predicated region
      $region29: #{tpu_custom_call.1} parent=5 // pred_check
        _
      $region30: #{tpu_custom_call.1} parent=5 // pred_check_branch
        %200 = sbr.rel (%p197) target = $region32
      $region31: #{tpu_custom_call.1} parent=5 // pred_region
        %s201 = ssub.s32 %s16, 1
        // Predicated region
        $region33: #{tpu_custom_call.1} parent=31 // pred_check
          %p202 = pneg %p54
        $region34: #{tpu_custom_call.1} parent=31 // pred_check_branch
          %204 = sbr.rel (%p202) target = $region36
        $region35: #{tpu_custom_call.1} parent=31 // pred_region
          %205 = dma.done [#allocation3], 256
        $region36: #{tpu_custom_call.1} parent=31 // pred_fallthru
          _
        %s206 = sand.u32 %s67, 1
        %s207 = scalar_lea.sflag [#allocation6], %s206
        %s208 = sand.u32 %s67, 1
        %s209 = smul.addr %s208, 128
        %s210 = scalar_lea.vmem [#allocation5], %s209
        // Predicated region
        $region37: #{tpu_custom_call.1} parent=31 // pred_check
          %p211 = pneg %p80
        $region38: #{tpu_custom_call.1} parent=31 // pred_check_branch
          %213 = sbr.rel (%p211) target = $region40
        $region39: #{tpu_custom_call.1} parent=31 // pred_region
          %214 = dma.done %s207, 2048
        $region40: #{tpu_custom_call.1} parent=31 // pred_fallthru
          _
        %p215 = pneg %p54
        %p216 = pneg %p51
        %s217 = sand.u32 %s67, 1
        %s218 = scalar_lea.sflag [#allocation6], %s217
        %s219 = sand.u32 %s67, 1
        %s220 = smul.addr %s219, 128
        %s221 = scalar_lea.vmem [#allocation5], %s220
        %p222 = pneg %p80
        %p223 = pneg %p77
        %p224 = scmp.lt.s32.totalorder %s26, 1
        %s225 = scalar_select %p224, %s26, 1
        %s226 = scalar_lea.vmem %s2, %s225
        %p227 = pneg %p106
        %p228 = pneg %p103
        %p229 = pneg %p134
        %p230 = pneg %p131
        %s231 = sand.u32 %s121, 1
        %s232 = scalar_lea.sflag [#allocation4], %s231
        %s233 = sand.u32 %s121, 1
        %s234 = smul.addr %s233, 16
        %s235 = scalar_lea.vmem [#allocation7], %s234
        %s236 = smul.u32 2, %s25
        %p237 = scmp.lt.s32.totalorder %s26, 1
        %s238 = scalar_select %p237, %s26, 1
        %s239 = scalar_lea.vmem %s2, %s238
        %s240 = smul.u32 2, %s25
        %v241 = vld [vmem:[#allocation2] sm:$0xff]
        %v242 = vld [vmem:[#allocation2 + $0x8] sm:$0xff]
        %v243 = vld [vmem:[%s210] sm:$0xff]
        %v244 = vld [vmem:[%s210 + $0x8] sm:$0xff]
        %v245 = vld [vmem:[%s210 + $0x10] sm:$0xff]
        %v246 = vld [vmem:[%s210 + $0x18] sm:$0xff]
        %v247 = vld [vmem:[%s210 + $0x20] sm:$0xff]
        %v248 = vld [vmem:[%s210 + $0x28] sm:$0xff]
        %v249 = vld [vmem:[%s210 + $0x30] sm:$0xff]
        %v250 = vld [vmem:[%s210 + $0x38] sm:$0xff]
        %v251 = vld [vmem:[%s210 + $0x40] sm:$0xff]
        %v252 = vld [vmem:[%s210 + $0x48] sm:$0xff]
        %v253 = vld [vmem:[%s210 + $0x50] sm:$0xff]
        %v254 = vld [vmem:[%s210 + $0x58] sm:$0xff]
        %v255 = vld [vmem:[%s210 + $0x60] sm:$0xff]
        %v256 = vld [vmem:[%s210 + $0x68] sm:$0xff]
        %v257 = vld [vmem:[%s210 + $0x70] sm:$0xff]
        %v258 = vld [vmem:[%s210 + $0x78] sm:$0xff]
        %v259 = vld [vmem:[%s239] sm:$0x1]
        %v261 = vlaneseq
        %v262 = vshrl.u32 %v261, 7
        %v263 = vsub.s32 0, %v262
        %v264 = vrot.slane %v259, %v263
        %266 = vmatprep.subr.mxu0 0.0
        %267 = vmatpush1.msra.mxu0 %v258
        %268 = vmatprep.subr.mxu0 0.0
        %269 = vmatpush1.msra.mxu0 %v257
        %270 = vmatprep.subr.mxu0 0.0
        %271 = vmatpush1.msra.mxu0 %v256
        %272 = vmatprep.subr.mxu0 0.0
        %273 = vmatpush1.msra.mxu0 %v255
        %274 = vmatprep.subr.mxu0 0.0
        %275 = vmatpush1.msra.mxu0 %v254
        %276 = vmatprep.subr.mxu0 0.0
        %277 = vmatpush1.msra.mxu0 %v253
        %278 = vmatprep.subr.mxu0 0.0
        %279 = vmatpush1.msra.mxu0 %v252
        %280 = vmatprep.subr.mxu0 0.0
        %281 = vmatpush1.msra.mxu0 %v251
        %282 = vmatprep.subr.mxu0 0.0
        %283 = vmatpush1.msra.mxu0 %v250
        %284 = vmatprep.subr.mxu0 0.0
        %285 = vmatpush1.msra.mxu0 %v249
        %286 = vmatprep.subr.mxu0 0.0
        %287 = vmatpush1.msra.mxu0 %v248
        %288 = vmatprep.subr.mxu0 0.0
        %289 = vmatpush1.msra.mxu0 %v247
        %290 = vmatprep.subr.mxu0 0.0
        %291 = vmatpush1.msra.mxu0 %v246
        %292 = vmatprep.subr.mxu0 0.0
        %293 = vmatpush1.msra.mxu0 %v245
        %294 = vmatprep.subr.mxu0 0.0
        %295 = vmatpush1.msra.mxu0 %v244
        %296 = vmatprep.subr.mxu0 0.0
        %297 = vmatpush1.msra.mxu0 %v243
        %298 = vmatprep.subr.mxu0 0.0
        %299 = vmatpush2.msra.mxu0 0.0
        %300 = vmatprep.subr.mxu0 0.0
        %301 = vmatpush2.msra.mxu0 0.0
        %302 = vmatprep.subr.mxu0 0.0
        %303 = vmatpush2.msra.mxu0 0.0
        %304 = vmatprep.subr.mxu0 0.0
        %305 = vmatpush2.msra.mxu0 0.0
        %306 = vmatprep.subr.mxu0 0.0
        %307 = vmatpush2.msra.mxu0 0.0
        %308 = vmatprep.subr.mxu0 0.0
        %309 = vmatpush2.msra.mxu0 0.0
        %310 = vmatprep.subr.mxu0 0.0
        %311 = vmatpush2.msra.mxu0 0.0
        %312 = vmatprep.subr.mxu0 0.0
        %313 = vmatpush2.msra.mxu0 0.0
        %314 = vmatprep.subr.mxu0 0.0
        %315 = vmatpush2.msra.mxu0 0.0
        %316 = vmatprep.subr.mxu0 0.0
        %317 = vmatpush2.msra.mxu0 0.0
        %318 = vmatprep.subr.mxu0 0.0
        %319 = vmatpush2.msra.mxu0 0.0
        %320 = vmatprep.subr.mxu0 0.0
        %321 = vmatpush2.msra.mxu0 0.0
        %322 = vmatprep.subr.mxu0 0.0
        %323 = vmatpush2.msra.mxu0 0.0
        %324 = vmatprep.subr.mxu0 0.0
        %325 = vmatpush2.msra.mxu0 0.0
        %326 = vmatprep.subr.mxu0 0.0
        %327 = vmatpush2.msra.mxu0 0.0
        %328 = vmatprep.subr.mxu0 0.0
        %329 = vmatpush2.msra.mxu0 0.0
        %330 = vmatprep.mubr.f32.mxu0 0.0
        %331 = vmatmul.mubr.f32.gmra.mxu0 %v241
        %v332 = vpop.f32.mrf.mxu0
        %v333 = vadd.f32 %v264, %v332
        %v334 = vpop.f32.mrf.mxu0
        %335 = vmatprep.mubr.f32.mxu0 0.0
        %336 = vmatmul.mubr.f32.gmra.mxu0 %v242
        %v337 = vpop.f32.mrf.mxu0
        %v338 = vadd.f32 %v264, %v337
        %v339 = vpop.f32.mrf.mxu0
        %340 = vdwg.mxu0
        %341 = vst [vmem:[%s235] sm:$0xff] %v333
        %342 = vst [vmem:[%s235 + $0x8] sm:$0xff] %v338
        %s343 = sand.u32 %s121, 1
        %s344 = scalar_lea.sflag [#allocation4], %s343
        %s345 = sand.u32 %s121, 1
        %s346 = smul.addr %s345, 16
        %s347 = scalar_lea.vmem [#allocation7], %s346
        // Predicated region
        $region41: #{tpu_custom_call.1} parent=31 // pred_check
          %p348 = pneg %p131
        $region42: #{tpu_custom_call.1} parent=31 // pred_check_branch
          %350 = sbr.rel (%p348) target = $region44
        $region43: #{tpu_custom_call.1} parent=31 // pred_region
          %s351 = smul.u32 2, %s25
          %s353 = ssub.s32 256, 256
          %354 = vsyncadd %s344, %s353
          %s355 = smul.addr %s351, 2
          %s356 = sadd.s32 %s26, %s355
          %s357 = smul.addr %s356, 128
          %s358 = scalar_lea.hbm %s3, %s357
          %s359 = sshll.u32 %s347, 4
          %s360 = int_to_ptr.vmem [resolvable:$true] %s359
          %365 = dma.vmem_to_hbm [thread:$0]  %s360, 256, %s358, %s344, 128, 256, 8
        $region44: #{tpu_custom_call.1} parent=31 // pred_fallthru
          _
      $region32: #{tpu_custom_call.1} parent=5 // pred_fallthru
        _
      %p366 = scmp.le.s32.totalorder 2, %s16
      // Predicated region
      $region45: #{tpu_custom_call.1} parent=5 // pred_check
        %p367 = pneg %p366
      $region46: #{tpu_custom_call.1} parent=5 // pred_check_branch
        %369 = sbr.rel (%p367) target = $region48
      $region47: #{tpu_custom_call.1} parent=5 // pred_region
        %s370 = ssub.s32 %s16, 2
        // Predicated region
        $region49: #{tpu_custom_call.1} parent=47 // pred_check
          %p371 = pneg %p137
        $region50: #{tpu_custom_call.1} parent=47 // pred_check_branch
          %373 = sbr.rel (%p371) target = $region52
        $region51: #{tpu_custom_call.1} parent=47 // pred_region
          %s374 = sand.u32 %s122, 1
          %s375 = scalar_lea.sflag [#allocation4], %s374
          %s376 = sand.u32 %s122, 1
          %s377 = smul.addr %s376, 16
          %s378 = scalar_lea.vmem [#allocation7], %s377
          %379 = dma.done %s375, 256
        $region52: #{tpu_custom_call.1} parent=47 // pred_fallthru
          _
      $region48: #{tpu_custom_call.1} parent=5 // pred_fallthru
        _
    $region6: #{tpu_custom_call.1} parent=1 // loop_footer
      %s20 = sadd.s32 1, %s16
    $region7: #{tpu_custom_call.1} parent=1 // loop_footer_branch
      %15 = sbr.rel target = $region3
    $region8: #{tpu_custom_call.1} parent=1 // loop_exit
      _
    %380 = vsyncpa [#allocation3], 1
    %s381 = scalar_lea.sflag [#allocation3], 1
    %382 = vsyncpa %s381, 1
    %383 = vsyncpa [#allocation6], 1
    %s384 = scalar_lea.sflag [#allocation6], 1
    %385 = vsyncpa %s384, 1
    %386 = vsyncpa [#allocation4], 1
    %s387 = scalar_lea.sflag [#allocation4], 1
    %388 = vsyncpa %s387, 1

</llo_original>
